<compile_context>
chip_gen: v7x
topology: tpu7x:2x2x1
jax: 0.10.0
libtpu: 0.0.40
codegen_flags: <defaults>
</compile_context>

<pallas_src>
import jax
import jax.numpy as jnp
from jax.experimental import pallas as pl
from jax.experimental.pallas import tpu as pltpu

_CHUNK = 128  # batch-tile granularity (sublane/lane friendly)


def _fwfm_kernel(x_ref, m_ref, o_ref):
    # x_ref: [TB, FD] input tile (native dtype, f32 or bf16)
    # m_ref: [FD, FD] bf16 = kron(triu(r,1)^T, I_D)
    # o_ref: [1, TB]  per-row interaction sums (lane-dense output block), f32
    x = x_ref[...]
    # y[b, f*D+d] = sum_g R[f, g] * x[b, g*D+d]   (single MXU matmul, f32 accumulate)
    y = jnp.dot(x.astype(jnp.bfloat16), m_ref[...],
                preferred_element_type=jnp.float32)          # [TB, FD] f32
    z = x.astype(jnp.float32) * y                            # f32 elementwise (VPU)
    o_ref[...] = jnp.sum(z, axis=1)[None, :]                 # [1, TB] lane reduce


def _round_up(x: int, m: int) -> int:
    return ((x + m - 1) // m) * m


def fwfm_transform(input_feature: jax.Array, pair_weights: jax.Array,
                   *, tb_max: int = 4096) -> jax.Array:
    """FwFM interaction: out[b] = sum_{i<j} r[i,j] * <x[b,i], x[b,j]>, shape [B, 1]."""
    b, f, d = input_feature.shape
    fd = f * d
    assert pair_weights.shape == (f, f)

    # Hoisted out of the kernel: strict-upper-triangle masking + kron expansion so the
    # pairwise interaction becomes a quadratic form x (kron(R^T, I)) x^T per row.
    # MXU operands are bf16 (accumulation stays f32 via preferred_element_type).
    r_masked = jnp.triu(pair_weights.astype(jnp.float32), k=1)        # [F, F]
    m = jnp.kron(r_masked.T, jnp.eye(d, dtype=jnp.float32))           # [FD, FD]
    m = m.astype(jnp.bfloat16)

    m_bytes = 2 * fd * fd
    if m_bytes > (16 << 20):
        # TODO(synk): for large F*D, block the M matmul over a K grid axis or switch to
        # the per-field weighted-sum formulation instead of the resident kron weight.
        raise NotImplementedError("F*D too large for the resident kron-weight path")

    x2 = input_feature.reshape(b, fd)          # lane-dense [B, F*D] layout, no copy pad

    itemsize = jnp.dtype(input_feature.dtype).itemsize
    # Target >= ~4 MiB (f32) / ~8 MiB (bf16) of input per grid step to amortize the
    # ~0.35 us per-step pipeline overhead.
    target_bytes = (8 << 20) if itemsize <= 2 else (4 << 20)
    tb = min(tb_max, max(_CHUNK, target_bytes // (fd * itemsize)))
    tb = min(_round_up(tb, _CHUNK), _round_up(b, _CHUNK))
    # v7x megacore: make sure the "parallel" axis has >= 2 (balanced) steps when the
    # batch is big enough, so both TensorCores get work.
    if b > 2 * _CHUNK and pl.cdiv(b, tb) < 2:
        tb = _round_up(pl.cdiv(b, 2), _CHUNK)
    nb = pl.cdiv(b, tb)

    # VMEM budget sized from the tile: double-buffered x, resident M, f32 intermediates.
    vmem_bytes = 2 * tb * fd * itemsize + 2 * m_bytes + 3 * tb * fd * 4 + (4 << 20)
    vmem_bytes = int(min(48 << 20, max(16 << 20, vmem_bytes)))

    out = pl.pallas_call(
        _fwfm_kernel,
        out_shape=jax.ShapeDtypeStruct((1, b), jnp.float32),
        grid=(nb,),
        in_specs=[
            pl.BlockSpec((tb, fd), lambda i: (i, 0)),     # batch tile (ragged last block)
            pl.BlockSpec((fd, fd), lambda i: (0, 0)),     # resident bf16 weight matrix
        ],
        out_specs=pl.BlockSpec((1, tb), lambda i: (0, i)),  # lane-dense output block
        compiler_params=pltpu.CompilerParams(
            dimension_semantics=("parallel",),              # shards across TCs on v7x
            vmem_limit_bytes=vmem_bytes,
        ),
    )(x2, m)

    return out.reshape(b, 1)


def fwfm_reference(input_feature: jax.Array, pair_weights: jax.Array) -> jax.Array:
    # High-precision XLA reference (exact-ish f32 Gram).
    x = input_feature.astype(jnp.float32)
    gram = jnp.einsum("bfd,bgd->bfg", x, x, precision=jax.lax.Precision.HIGHEST)
    f = pair_weights.shape[0]
    mask = jnp.triu(jnp.ones((f, f), jnp.float32), k=1)
    return jnp.sum(gram * (pair_weights.astype(jnp.float32) * mask)[None],
                   axis=(1, 2))[:, None]


if __name__ == "__main__":
    feature_numb, dim = 8, 32            # small shapes consistent with (featureNumb, dim)
    key = jax.random.PRNGKey(0)
    kx, kr = jax.random.split(key)
    r = 0.1 * jax.random.normal(kr, (feature_numb, feature_numb), dtype=jnp.float32)

    # Tolerances cover the bf16 MXU operand path (errors from a formula/masking/layout
    # bug would be O(1), well outside these bounds).

    # 1) tiny batch (single ragged block of 128 rows)
    batch = 16
    x = jax.random.normal(kx, (batch, feature_numb, dim), dtype=jnp.float32)
    out = jax.block_until_ready(fwfm_transform(x, r))
    ref = fwfm_reference(x, r)
    assert out.shape == (batch, 1)
    assert jnp.allclose(out, ref, atol=0.2, rtol=5e-2)

    # 2) batch that exercises the 2-step (megacore-friendly) grid with a ragged tail
    batch2 = 300
    x2 = jax.random.normal(kx, (batch2, feature_numb, dim), dtype=jnp.float32)
    out2 = jax.block_until_ready(fwfm_transform(x2, r))
    ref2 = fwfm_reference(x2, r)
    assert out2.shape == (batch2, 1)
    assert jnp.allclose(out2, ref2, atol=0.2, rtol=5e-2)

    # 3) same batch with a small tile cap -> 3-step grid (128-row tiles, ragged tail)
    out3 = jax.block_until_ready(fwfm_transform(x2, r, tb_max=128))
    assert jnp.allclose(out3, ref2, atol=0.2, rtol=5e-2)

    # 4) bf16 input staging path (halves HBM traffic); accumulation stays f32
    out_bf16 = jax.block_until_ready(fwfm_transform(x2.astype(jnp.bfloat16), r))
    assert out_bf16.shape == (batch2, 1)
    assert jnp.allclose(out_bf16, ref2, atol=0.3, rtol=5e-2)

    print("KERNEL_OK")
</pallas_src>

<mosaic_0001>
module attributes {stable_mosaic.version = 11 : i64} {
  func.func @_fwfm_kernel(%arg0: i32, %arg1: memref<128x256xf32, #tpu.memory_space<vmem>>, %arg2: memref<256x256xbf16, #tpu.memory_space<vmem>>, %arg3: memref<1x128xf32, #tpu.memory_space<vmem>>) attributes {dimension_semantics = [#tpu.dimension_semantics<parallel>], iteration_bounds = array<i64: 1>, scalar_prefetch = 0 : i64, scratch_operands = 0 : i64, tpu.core_type = #tpu.core_type<tc>, window_params = [{transform_indices = @transform_0, window_bounds = array<i64: 128, 256>}, {pipeline_mode = #tpu.pipeline_mode<synchronous>, transform_indices = @transform_1, window_bounds = array<i64: 256, 256>}, {transform_indices = @transform_2, window_bounds = array<i64: 1, 128>}]} {
    %c0 = arith.constant 0 : index
    %c0_0 = arith.constant 0 : index
    %0 = vector.load %arg1[%c0, %c0_0] : memref<128x256xf32, #tpu.memory_space<vmem>>, vector<128x256xf32>
    %1 = arith.truncf %0 : vector<128x256xf32> to vector<128x256xbf16>
    %c0_1 = arith.constant 0 : index
    %c0_2 = arith.constant 0 : index
    %2 = vector.load %arg2[%c0_1, %c0_2] : memref<256x256xbf16, #tpu.memory_space<vmem>>, vector<256x256xbf16>
    %cst = arith.constant dense<0.000000e+00> : vector<128x256xf32>
    %3 = tpu.matmul %1, %2, %cst {dimension_numbers = #tpu.dot_dimension_numbers<[1], [0], [0], [1], [0, 0, 1, 1], [], []>} : vector<128x256xbf16>, vector<256x256xbf16>, vector<128x256xf32> -> vector<128x256xf32>
    %4 = arith.mulf %0, %3 : vector<128x256xf32>
    %cst_3 = arith.constant dense<0.000000e+00> : vector<128xf32>
    %5 = vector.multi_reduction <add>, %4, %cst_3 [1] : vector<128x256xf32> to vector<128xf32>
    %6 = vector.shape_cast %5 : vector<128xf32> to vector<1x128xf32>
    %c0_4 = arith.constant 0 : index
    %c0_5 = arith.constant 0 : index
    %7 = vector.load %arg3[%c0_4, %c0_5] : memref<1x128xf32, #tpu.memory_space<vmem>>, vector<1x128xf32>
    tpu.vector_store %arg3[%c0_4, %c0_5], %6 {strides = array<i32>} : memref<1x128xf32, #tpu.memory_space<vmem>>, vector<1x128xf32>,
    return
  }
  func.func @transform_0(%arg0: i32) -> (i32, i32) {
    %c0_i32 = arith.constant 0 : i32
    %c0_i32_0 = arith.constant 0 : i32
    return %arg0, %c0_i32 : i32, i32
  }
  func.func @transform_1(%arg0: i32) -> (i32, i32) {
    %c0_i32 = arith.constant 0 : i32
    %c0_i32_0 = arith.constant 0 : i32
    %c0_i32_1 = arith.constant 0 : i32
    return %c0_i32, %c0_i32_0 : i32, i32
  }
  func.func @transform_2(%arg0: i32) -> (i32, i32) {
    %c0_i32 = arith.constant 0 : i32
    %c0_i32_0 = arith.constant 0 : i32
    return %c0_i32, %arg0 : i32, i32
  }
}

</mosaic_0001>

<llo_original>
// kernel: tpu_custom_call.1
$region0: #{tpu_custom_call.1}
  #allocation0 [shape = 'u32[]', space=smem, size = 0x4, offset = 0x4, fixed_abs, tag = 'smem constant byte address 0x4 - core index']
  #allocation1 [shape = 'u32[144,128]{1,0:T(1,128)}', space=vmem, size = 0x12000, scoped, tag = 'internal scratch']
  %s0 = inlined_call_operand.hbm [shape: f32[16,256], index: 0, kind: input, shape index: {}]
  %s1 = inlined_call_operand.hbm [shape: bf16[256,256], index: 1, kind: input, shape index: {}]
  %s2 = inlined_call_operand.hbm [shape: f32[1,16], index: 2, kind: output, shape index: {}]
  %s3 = sld [smem:[#allocation0]]
  $region26: #{tpu_custom_call.1} parent=0
    _
  %s5 = ssub.s32 1, %s3
  %s6 = scalar_select 0, %s5, %s3
  $region1: #{tpu_custom_call.1} parent=0
    #allocation2 [shape = 'u8[131072]{0}', space=vmem, size = 0x20000, scoped, tag = 'input window, operand 0, single buffered']
    #allocation3 [shape = 's32[1]{0}', space=sflag, size = 0x4, scoped, tag = 'scoped memory for tpu_custom_call.1']
    #allocation4 [shape = 's32[1]{0}', space=sflag, size = 0x4, scoped, tag = 'scoped memory for tpu_custom_call.1']
    #allocation5 [shape = 'u8[131072]{0}', space=vmem, size = 0x20000, scoped, tag = 'input window, operand 1, single buffered']
    #allocation6 [shape = 's32[1]{0}', space=sflag, size = 0x4, scoped, tag = 'scoped memory for tpu_custom_call.1']
    #allocation7 [shape = 'u8[512]{0}', space=vmem, size = 0x400, scoped, tag = 'output window, operand 0, single buffered']
    %7 = vsyncpa [#allocation3], 0
    %8 = vsyncpa [#allocation6], 0
    %9 = vsyncpa [#allocation4], 0
    // Predicated region
    $region2: #{tpu_custom_call.1} parent=1 // pred_check
      _
    $region3: #{tpu_custom_call.1} parent=1 // pred_check_branch
      %11 = sbr.rel (0) target = $region5
    $region4: #{tpu_custom_call.1} parent=1 // pred_region
      %s13 = ssub.s32 4096, 512
      %14 = vsyncadd [#allocation3], %s13
      %s15 = sshll.u32 [#allocation2], 4
      %s16 = int_to_ptr.vmem [resolvable:$true] %s15
      %21 = dma.hbm_to_vmem [thread:$0]  %s0, 512, %s16, [#allocation3], 256, 256, 16
    $region5: #{tpu_custom_call.1} parent=1 // pred_fallthru
      _
    // Predicated region
    $region6: #{tpu_custom_call.1} parent=1 // pred_check
      _
    $region7: #{tpu_custom_call.1} parent=1 // pred_check_branch
      %23 = sbr.rel (0) target = $region9
    $region8: #{tpu_custom_call.1} parent=1 // pred_region
      %s25 = ssub.s32 4096, 4096
      %26 = vsyncadd [#allocation6], %s25
      %s27 = sshll.u32 [#allocation5], 4
      %s28 = int_to_ptr.vmem [resolvable:$true] %s27
      %33 = dma.hbm_to_vmem [thread:$0]  %s1, 4096, %s28, [#allocation6], 128, 128, 8
    $region9: #{tpu_custom_call.1} parent=1 // pred_fallthru
      _
    // Predicated region
    $region10: #{tpu_custom_call.1} parent=1 // pred_check
      _
    $region11: #{tpu_custom_call.1} parent=1 // pred_check_branch
      %35 = sbr.rel (0) target = $region13
    $region12: #{tpu_custom_call.1} parent=1 // pred_region
      %36 = dma.done [#allocation3], 4096
    $region13: #{tpu_custom_call.1} parent=1 // pred_fallthru
      _
    // Predicated region
    $region14: #{tpu_custom_call.1} parent=1 // pred_check
      _
    $region15: #{tpu_custom_call.1} parent=1 // pred_check_branch
      %38 = sbr.rel (0) target = $region17
    $region16: #{tpu_custom_call.1} parent=1 // pred_region
      %39 = dma.done [#allocation6], 4096
    $region17: #{tpu_custom_call.1} parent=1 // pred_fallthru
      _
    %v40 = vld [vmem:[#allocation2] sm:$0xff]
    %v41 = vld [vmem:[#allocation2 + $0x8] sm:$0xff]
    %v42 = vld [vmem:[#allocation2 + $0x10] sm:$0xff]
    %v43 = vld [vmem:[#allocation2 + $0x18] sm:$0xff]
    %v44 = vld [vmem:[#allocation2 + $0x20] sm:$0xff]
    %v45 = vld [vmem:[#allocation2 + $0x28] sm:$0xff]
    %v46 = vld [vmem:[#allocation2 + $0x30] sm:$0xff]
    %v47 = vld [vmem:[#allocation2 + $0x38] sm:$0xff]
    %v48 = vld [vmem:[#allocation2 + $0x40] sm:$0xff]
    %v49 = vld [vmem:[#allocation2 + $0x48] sm:$0xff]
    %v50 = vld [vmem:[#allocation2 + $0x50] sm:$0xff]
    %v51 = vld [vmem:[#allocation2 + $0x58] sm:$0xff]
    %v52 = vld [vmem:[#allocation2 + $0x60] sm:$0xff]
    %v53 = vld [vmem:[#allocation2 + $0x68] sm:$0xff]
    %v54 = vld [vmem:[#allocation2 + $0x70] sm:$0xff]
    %v55 = vld [vmem:[#allocation2 + $0x78] sm:$0xff]
    %v56 = vld [vmem:[#allocation2 + $0x80] sm:$0xff]
    %v57 = vld [vmem:[#allocation2 + $0x88] sm:$0xff]
    %v58 = vld [vmem:[#allocation2 + $0x90] sm:$0xff]
    %v59 = vld [vmem:[#allocation2 + $0x98] sm:$0xff]
    %v60 = vld [vmem:[#allocation2 + $0xa0] sm:$0xff]
    %v61 = vld [vmem:[#allocation2 + $0xa8] sm:$0xff]
    %v62 = vld [vmem:[#allocation2 + $0xb0] sm:$0xff]
    %v63 = vld [vmem:[#allocation2 + $0xb8] sm:$0xff]
    %v64 = vld [vmem:[#allocation2 + $0xc0] sm:$0xff]
    %v65 = vld [vmem:[#allocation2 + $0xc8] sm:$0xff]
    %v66 = vld [vmem:[#allocation2 + $0xd0] sm:$0xff]
    %v67 = vld [vmem:[#allocation2 + $0xd8] sm:$0xff]
    %v68 = vld [vmem:[#allocation2 + $0xe0] sm:$0xff]
    %v69 = vld [vmem:[#allocation2 + $0xe8] sm:$0xff]
    %v70 = vld [vmem:[#allocation2 + $0xf0] sm:$0xff]
    %v71 = vld [vmem:[#allocation2 + $0xf8] sm:$0xff]
    %v72 = vpack.c.bf16 %v42, %v40
    %v73 = vpack.c.bf16 %v43, %v41
    %v74 = vpack.c.bf16 %v46, %v44
    %v75 = vpack.c.bf16 %v47, %v45
    %v76 = vpack.c.bf16 %v50, %v48
    %v77 = vpack.c.bf16 %v51, %v49
    %v78 = vpack.c.bf16 %v54, %v52
    %v79 = vpack.c.bf16 %v55, %v53
    %v80 = vpack.c.bf16 %v58, %v56
    %v81 = vpack.c.bf16 %v59, %v57
    %v82 = vpack.c.bf16 %v62, %v60
    %v83 = vpack.c.bf16 %v63, %v61
    %v84 = vpack.c.bf16 %v66, %v64
    %v85 = vpack.c.bf16 %v67, %v65
    %v86 = vpack.c.bf16 %v70, %v68
    %v87 = vpack.c.bf16 %v71, %v69
    %v88 = vld [vmem:[#allocation5] sm:$0xff]
    %v89 = vld [vmem:[#allocation5 + $0x8] sm:$0xff]
    %v90 = vld [vmem:[#allocation5 + $0x10] sm:$0xff]
    %v91 = vld [vmem:[#allocation5 + $0x18] sm:$0xff]
    %v92 = vld [vmem:[#allocation5 + $0x20] sm:$0xff]
    %v93 = vld [vmem:[#allocation5 + $0x28] sm:$0xff]
    %v94 = vld [vmem:[#allocation5 + $0x30] sm:$0xff]
    %v95 = vld [vmem:[#allocation5 + $0x38] sm:$0xff]
    %v96 = vld [vmem:[#allocation5 + $0x40] sm:$0xff]
    %v97 = vld [vmem:[#allocation5 + $0x48] sm:$0xff]
    %v98 = vld [vmem:[#allocation5 + $0x50] sm:$0xff]
    %v99 = vld [vmem:[#allocation5 + $0x58] sm:$0xff]
    %v100 = vld [vmem:[#allocation5 + $0x60] sm:$0xff]
    %v101 = vld [vmem:[#allocation5 + $0x68] sm:$0xff]
    %v102 = vld [vmem:[#allocation5 + $0x70] sm:$0xff]
    %v103 = vld [vmem:[#allocation5 + $0x78] sm:$0xff]
    %v104 = vld [vmem:[#allocation5 + $0x80] sm:$0xff]
    %v105 = vld [vmem:[#allocation5 + $0x88] sm:$0xff]
    %v106 = vld [vmem:[#allocation5 + $0x90] sm:$0xff]
    %v107 = vld [vmem:[#allocation5 + $0x98] sm:$0xff]
    %v108 = vld [vmem:[#allocation5 + $0xa0] sm:$0xff]
    %v109 = vld [vmem:[#allocation5 + $0xa8] sm:$0xff]
    %v110 = vld [vmem:[#allocation5 + $0xb0] sm:$0xff]
    %v111 = vld [vmem:[#allocation5 + $0xb8] sm:$0xff]
    %v112 = vld [vmem:[#allocation5 + $0xc0] sm:$0xff]
    %v113 = vld [vmem:[#allocation5 + $0xc8] sm:$0xff]
    %v114 = vld [vmem:[#allocation5 + $0xd0] sm:$0xff]
    %v115 = vld [vmem:[#allocation5 + $0xd8] sm:$0xff]
    %v116 = vld [vmem:[#allocation5 + $0xe0] sm:$0xff]
    %v117 = vld [vmem:[#allocation5 + $0xe8] sm:$0xff]
    %v118 = vld [vmem:[#allocation5 + $0xf0] sm:$0xff]
    %v119 = vld [vmem:[#allocation5 + $0xf8] sm:$0xff]
    %v152 = vunpack.c.l.b16 %v88
    %v153 = vunpack.c.h.b16 %v88
    %v154 = vunpack.c.l.b16 %v89
    %v155 = vunpack.c.h.b16 %v89
    %v156 = vunpack.c.l.b16 %v90
    %v157 = vunpack.c.h.b16 %v90
    %v158 = vunpack.c.l.b16 %v91
    %v159 = vunpack.c.h.b16 %v91
    %v160 = vunpack.c.l.b16 %v92
    %v161 = vunpack.c.h.b16 %v92
    %v162 = vunpack.c.l.b16 %v93
    %v163 = vunpack.c.h.b16 %v93
    %v164 = vunpack.c.l.b16 %v94
    %v165 = vunpack.c.h.b16 %v94
    %v166 = vunpack.c.l.b16 %v95
    %v167 = vunpack.c.h.b16 %v95
    %v168 = vunpack.c.l.b16 %v96
    %v169 = vunpack.c.h.b16 %v96
    %v170 = vunpack.c.l.b16 %v97
    %v171 = vunpack.c.h.b16 %v97
    %v172 = vunpack.c.l.b16 %v98
    %v173 = vunpack.c.h.b16 %v98
    %v174 = vunpack.c.l.b16 %v99
    %v175 = vunpack.c.h.b16 %v99
    %v176 = vunpack.c.l.b16 %v100
    %v177 = vunpack.c.h.b16 %v100
    %v178 = vunpack.c.l.b16 %v101
    %v179 = vunpack.c.h.b16 %v101
    %v180 = vunpack.c.l.b16 %v102
    %v181 = vunpack.c.h.b16 %v102
    %v182 = vunpack.c.l.b16 %v103
    %v183 = vunpack.c.h.b16 %v103
    %v184 = vunpack.c.l.b16 %v104
    %v185 = vunpack.c.h.b16 %v104
    %v186 = vunpack.c.l.b16 %v105
    %v187 = vunpack.c.h.b16 %v105
    %v188 = vunpack.c.l.b16 %v106
    %v189 = vunpack.c.h.b16 %v106
    %v190 = vunpack.c.l.b16 %v107
    %v191 = vunpack.c.h.b16 %v107
    %v192 = vunpack.c.l.b16 %v108
    %v193 = vunpack.c.h.b16 %v108
    %v194 = vunpack.c.l.b16 %v109
    %v195 = vunpack.c.h.b16 %v109
    %v196 = vunpack.c.l.b16 %v110
    %v197 = vunpack.c.h.b16 %v110
    %v198 = vunpack.c.l.b16 %v111
    %v199 = vunpack.c.h.b16 %v111
    %v200 = vunpack.c.l.b16 %v112
    %v201 = vunpack.c.h.b16 %v112
    %v202 = vunpack.c.l.b16 %v113
    %v203 = vunpack.c.h.b16 %v113
    %v204 = vunpack.c.l.b16 %v114
    %v205 = vunpack.c.h.b16 %v114
    %v206 = vunpack.c.l.b16 %v115
    %v207 = vunpack.c.h.b16 %v115
    %v208 = vunpack.c.l.b16 %v116
    %v209 = vunpack.c.h.b16 %v116
    %v210 = vunpack.c.l.b16 %v117
    %v211 = vunpack.c.h.b16 %v117
    %v212 = vunpack.c.l.b16 %v118
    %v213 = vunpack.c.h.b16 %v118
    %v214 = vunpack.c.l.b16 %v119
    %v215 = vunpack.c.h.b16 %v119
    %v216 = vpack.c.b16 %v154, %v152
    %v217 = vpack.c.b16 %v155, %v153
    %v218 = vpack.c.b16 %v158, %v156
    %v219 = vpack.c.b16 %v159, %v157
    %v220 = vpack.c.b16 %v162, %v160
    %v221 = vpack.c.b16 %v163, %v161
    %v222 = vpack.c.b16 %v166, %v164
    %v223 = vpack.c.b16 %v167, %v165
    %v224 = vpack.c.b16 %v170, %v168
    %v225 = vpack.c.b16 %v171, %v169
    %v226 = vpack.c.b16 %v174, %v172
    %v227 = vpack.c.b16 %v175, %v173
    %v228 = vpack.c.b16 %v178, %v176
    %v229 = vpack.c.b16 %v179, %v177
    %v230 = vpack.c.b16 %v182, %v180
    %v231 = vpack.c.b16 %v183, %v181
    %v232 = vpack.c.b16 %v186, %v184
    %v233 = vpack.c.b16 %v187, %v185
    %v234 = vpack.c.b16 %v190, %v188
    %v235 = vpack.c.b16 %v191, %v189
    %v236 = vpack.c.b16 %v194, %v192
    %v237 = vpack.c.b16 %v195, %v193
    %v238 = vpack.c.b16 %v198, %v196
    %v239 = vpack.c.b16 %v199, %v197
    %v240 = vpack.c.b16 %v202, %v200
    %v241 = vpack.c.b16 %v203, %v201
    %v242 = vpack.c.b16 %v206, %v204
    %v243 = vpack.c.b16 %v207, %v205
    %v244 = vpack.c.b16 %v210, %v208
    %v245 = vpack.c.b16 %v211, %v209
    %v246 = vpack.c.b16 %v214, %v212
    %v247 = vpack.c.b16 %v215, %v213
    %280 = vmatprep.subr.bf16.mxu0 %v217
    %281 = vmatpush1.bf16.msra.mxu0 %v216
    %282 = vmatprep.subr.bf16.mxu0 %v219
    %283 = vmatpush1.bf16.msra.mxu0 %v218
    %284 = vmatprep.subr.bf16.mxu0 %v221
    %285 = vmatpush1.bf16.msra.mxu0 %v220
    %286 = vmatprep.subr.bf16.mxu0 %v223
    %287 = vmatpush1.bf16.msra.mxu0 %v222
    %288 = vmatprep.subr.bf16.mxu0 %v225
    %289 = vmatpush1.bf16.msra.mxu0 %v224
    %290 = vmatprep.subr.bf16.mxu0 %v227
    %291 = vmatpush1.bf16.msra.mxu0 %v226
    %292 = vmatprep.subr.bf16.mxu0 %v229
    %293 = vmatpush1.bf16.msra.mxu0 %v228
    %294 = vmatprep.subr.bf16.mxu0 %v231
    %295 = vmatpush1.bf16.msra.mxu0 %v230
    %296 = vmatprep.subr.bf16.mxu0 %v233
    %297 = vmatpush1.bf16.msra.mxu0 %v232
    %298 = vmatprep.subr.bf16.mxu0 %v235
    %299 = vmatpush1.bf16.msra.mxu0 %v234
    %300 = vmatprep.subr.bf16.mxu0 %v237
    %301 = vmatpush1.bf16.msra.mxu0 %v236
    %302 = vmatprep.subr.bf16.mxu0 %v239
    %303 = vmatpush1.bf16.msra.mxu0 %v238
    %304 = vmatprep.subr.bf16.mxu0 %v241
    %305 = vmatpush1.bf16.msra.mxu0 %v240
    %306 = vmatprep.subr.bf16.mxu0 %v243
    %307 = vmatpush1.bf16.msra.mxu0 %v242
    %308 = vmatprep.subr.bf16.mxu0 %v245
    %309 = vmatpush1.bf16.msra.mxu0 %v244
    %310 = vmatprep.subr.bf16.mxu0 %v247
    %311 = vmatpush1.bf16.msra.mxu0 %v246
    %312 = vmatprep.mubr.bf16.mxu0 %v73
    %313 = vmatmul.mubr.bf16.gmra.mrb[0].mxu0 %v72
    %v314 = vpop.f32.mrb[0].mxu0
    %v315 = vadd.f32 0.0, %v314
    %v316 = vpop.f32.mrb[0].mxu0
    %v317 = vadd.f32 0.0, %v316
    %v318 = vpop.f32.mrb[0].mxu0
    %v319 = vadd.f32 0.0, %v318
    %v320 = vpop.f32.mrb[0].mxu0
    %v321 = vadd.f32 0.0, %v320
    %322 = vmatprep.mubr.bf16.mxu0 %v75
    %323 = vmatmul.mubr.bf16.gmra.mrb[0].mxu0 %v74
    %v324 = vpop.f32.mrb[0].mxu0
    %v325 = vadd.f32 0.0, %v324
    %v326 = vpop.f32.mrb[0].mxu0
    %v327 = vadd.f32 0.0, %v326
    %v328 = vpop.f32.mrb[0].mxu0
    %v329 = vadd.f32 0.0, %v328
    %v330 = vpop.f32.mrb[0].mxu0
    %v331 = vadd.f32 0.0, %v330
    %332 = vmatprep.mubr.bf16.mxu0 %v77
    %333 = vmatmul.mubr.bf16.gmra.mrb[0].mxu0 %v76
    %v334 = vpop.f32.mrb[0].mxu0
    %v335 = vadd.f32 0.0, %v334
    %v336 = vpop.f32.mrb[0].mxu0
    %v337 = vadd.f32 0.0, %v336
    %v338 = vpop.f32.mrb[0].mxu0
    %v339 = vadd.f32 0.0, %v338
    %v340 = vpop.f32.mrb[0].mxu0
    %v341 = vadd.f32 0.0, %v340
    %342 = vmatprep.mubr.bf16.mxu0 %v79
    %343 = vmatmul.mubr.bf16.gmra.mrb[0].mxu0 %v78
    %v344 = vpop.f32.mrb[0].mxu0
    %v345 = vadd.f32 0.0, %v344
    %v346 = vpop.f32.mrb[0].mxu0
    %v347 = vadd.f32 0.0, %v346
    %v348 = vpop.f32.mrb[0].mxu0
    %v349 = vadd.f32 0.0, %v348
    %v350 = vpop.f32.mrb[0].mxu0
    %v351 = vadd.f32 0.0, %v350
    %352 = vmatprep.mubr.bf16.mxu0 %v81
    %353 = vmatmul.mubr.bf16.gmra.mrb[0].mxu0 %v80
    %v354 = vpop.f32.mrb[0].mxu0
    %v355 = vadd.f32 0.0, %v354
    %v356 = vpop.f32.mrb[0].mxu0
    %v357 = vadd.f32 0.0, %v356
    %v358 = vpop.f32.mrb[0].mxu0
    %v359 = vadd.f32 0.0, %v358
    %v360 = vpop.f32.mrb[0].mxu0
    %v361 = vadd.f32 0.0, %v360
    %362 = vmatprep.mubr.bf16.mxu0 %v83
    %363 = vmatmul.mubr.bf16.gmra.mrb[0].mxu0 %v82
    %v364 = vpop.f32.mrb[0].mxu0
    %v365 = vadd.f32 0.0, %v364
    %v366 = vpop.f32.mrb[0].mxu0
    %v367 = vadd.f32 0.0, %v366
    %v368 = vpop.f32.mrb[0].mxu0
    %v369 = vadd.f32 0.0, %v368
    %v370 = vpop.f32.mrb[0].mxu0
    %v371 = vadd.f32 0.0, %v370
    %372 = vmatprep.mubr.bf16.mxu0 %v85
    %373 = vmatmul.mubr.bf16.gmra.mrb[0].mxu0 %v84
    %v374 = vpop.f32.mrb[0].mxu0
    %v375 = vadd.f32 0.0, %v374
    %v376 = vpop.f32.mrb[0].mxu0
    %v377 = vadd.f32 0.0, %v376
    %v378 = vpop.f32.mrb[0].mxu0
    %v379 = vadd.f32 0.0, %v378
    %v380 = vpop.f32.mrb[0].mxu0
    %v381 = vadd.f32 0.0, %v380
    %382 = vmatprep.mubr.bf16.mxu0 %v87
    %383 = vmatmul.mubr.bf16.gmra.mrb[0].mxu0 %v86
    %v384 = vpop.f32.mrb[0].mxu0
    %v385 = vadd.f32 0.0, %v384
    %v386 = vpop.f32.mrb[0].mxu0
    %v387 = vadd.f32 0.0, %v386
    %v388 = vpop.f32.mrb[0].mxu0
    %v389 = vadd.f32 0.0, %v388
    %v390 = vpop.f32.mrb[0].mxu0
    %v391 = vadd.f32 0.0, %v390
    %392 = vdwg.mxu0
    %v393 = vmul.f32 %v40, %v315
    %v394 = vmul.f32 %v41, %v317
    %v395 = vmul.f32 %v42, %v319
    %v396 = vmul.f32 %v43, %v321
    %v397 = vmul.f32 %v44, %v325
    %v398 = vmul.f32 %v45, %v327
    %v399 = vmul.f32 %v46, %v329
    %v400 = vmul.f32 %v47, %v331
    %v401 = vmul.f32 %v48, %v335
    %v402 = vmul.f32 %v49, %v337
    %v403 = vmul.f32 %v50, %v339
    %v404 = vmul.f32 %v51, %v341
    %v405 = vmul.f32 %v52, %v345
    %v406 = vmul.f32 %v53, %v347
    %v407 = vmul.f32 %v54, %v349
    %v408 = vmul.f32 %v55, %v351
    %v409 = vmul.f32 %v56, %v355
    %v410 = vmul.f32 %v57, %v357
    %v411 = vmul.f32 %v58, %v359
    %v412 = vmul.f32 %v59, %v361
    %v413 = vmul.f32 %v60, %v365
    %v414 = vmul.f32 %v61, %v367
    %v415 = vmul.f32 %v62, %v369
    %v416 = vmul.f32 %v63, %v371
    %v417 = vmul.f32 %v64, %v375
    %v418 = vmul.f32 %v65, %v377
    %v419 = vmul.f32 %v66, %v379
    %v420 = vmul.f32 %v67, %v381
    %v421 = vmul.f32 %v68, %v385
    %v422 = vmul.f32 %v69, %v387
    %v423 = vmul.f32 %v70, %v389
    %v424 = vmul.f32 %v71, %v391
    %v425 = vadd.f32 %v393, %v394
    %426 = vadd.xlane.f32.xlu0 %v425
    %v427 = vpop.xlane.xlu0 %426
    %v428 = vadd.f32 %v395, %v396
    %429 = vadd.xlane.f32.xlu0 %v428
    %v430 = vpop.xlane.xlu0 %429
    %v431 = vadd.f32 %v397, %v398
    %432 = vadd.xlane.f32.xlu0 %v431
    %v433 = vpop.xlane.xlu0 %432
    %v434 = vadd.f32 %v399, %v400
    %435 = vadd.xlane.f32.xlu0 %v434
    %v436 = vpop.xlane.xlu0 %435
    %v437 = vadd.f32 %v401, %v402
    %438 = vadd.xlane.f32.xlu0 %v437
    %v439 = vpop.xlane.xlu0 %438
    %v440 = vadd.f32 %v403, %v404
    %441 = vadd.xlane.f32.xlu0 %v440
    %v442 = vpop.xlane.xlu0 %441
    %v443 = vadd.f32 %v405, %v406
    %444 = vadd.xlane.f32.xlu0 %v443
    %v445 = vpop.xlane.xlu0 %444
    %v446 = vadd.f32 %v407, %v408
    %447 = vadd.xlane.f32.xlu0 %v446
    %v448 = vpop.xlane.xlu0 %447
    %v449 = vadd.f32 %v409, %v410
    %450 = vadd.xlane.f32.xlu0 %v449
    %v451 = vpop.xlane.xlu0 %450
    %v452 = vadd.f32 %v411, %v412
    %453 = vadd.xlane.f32.xlu0 %v452
    %v454 = vpop.xlane.xlu0 %453
    %v455 = vadd.f32 %v413, %v414
    %456 = vadd.xlane.f32.xlu0 %v455
    %v457 = vpop.xlane.xlu0 %456
    %v458 = vadd.f32 %v415, %v416
    %459 = vadd.xlane.f32.xlu0 %v458
    %v460 = vpop.xlane.xlu0 %459
    %v461 = vadd.f32 %v417, %v418
    %462 = vadd.xlane.f32.xlu0 %v461
    %v463 = vpop.xlane.xlu0 %462
    %v464 = vadd.f32 %v419, %v420
    %465 = vadd.xlane.f32.xlu0 %v464
    %v466 = vpop.xlane.xlu0 %465
    %v467 = vadd.f32 %v421, %v422
    %468 = vadd.xlane.f32.xlu0 %v467
    %v469 = vpop.xlane.xlu0 %468
    %v470 = vadd.f32 %v423, %v424
    %471 = vadd.xlane.f32.xlu0 %v470
    %v472 = vpop.xlane.xlu0 %471
    %v489 = vlaneseq
    %v490 = vand.u32 %v489, 127
    %v491 = vlaneseq
    %v492 = vshrl.u32 %v491, 7
    %v493 = vsub.s32 %v490, %v492
    %v494 = vrot.slane %v427, %v493
    %v495 = vadd.s32 %v490, 4294967288
    %v496 = vlaneseq
    %v497 = vshrl.u32 %v496, 7
    %v498 = vsub.s32 %v495, %v497
    %v499 = vrot.slane %v430, %v498
    %vm500 = vcmask 130112
    %v501 = vsel %vm500, %v499, %v494
    %v502 = vadd.s32 %v490, 4294967280
    %v503 = vlaneseq
    %v504 = vshrl.u32 %v503, 7
    %v505 = vsub.s32 %v502, %v504
    %v506 = vrot.slane %v433, %v505
    %vm507 = vcmask 195712
    %v508 = vsel %vm507, %v506, %v501
    %v509 = vadd.s32 %v490, 4294967272
    %v510 = vlaneseq
    %v511 = vshrl.u32 %v510, 7
    %v512 = vsub.s32 %v509, %v511
    %v513 = vrot.slane %v436, %v512
    %vm514 = vcmask 261312
    %v515 = vsel %vm514, %v513, %v508
    %v516 = vadd.s32 %v490, 4294967264
    %v517 = vlaneseq
    %v518 = vshrl.u32 %v517, 7
    %v519 = vsub.s32 %v516, %v518
    %v520 = vrot.slane %v439, %v519
    %vm521 = vcmask 326912
    %v522 = vsel %vm521, %v520, %v515
    %v523 = vadd.s32 %v490, 4294967256
    %v524 = vlaneseq
    %v525 = vshrl.u32 %v524, 7
    %v526 = vsub.s32 %v523, %v525
    %v527 = vrot.slane %v442, %v526
    %vm528 = vcmask 392512
    %v529 = vsel %vm528, %v527, %v522
    %v530 = vadd.s32 %v490, 4294967248
    %v531 = vlaneseq
    %v532 = vshrl.u32 %v531, 7
    %v533 = vsub.s32 %v530, %v532
    %v534 = vrot.slane %v445, %v533
    %vm535 = vcmask 458112
    %v536 = vsel %vm535, %v534, %v529
    %v537 = vadd.s32 %v490, 4294967240
    %v538 = vlaneseq
    %v539 = vshrl.u32 %v538, 7
    %v540 = vsub.s32 %v537, %v539
    %v541 = vrot.slane %v448, %v540
    %vm542 = vcmask 523712
    %v543 = vsel %vm542, %v541, %v536
    %v544 = vadd.s32 %v490, 4294967232
    %v545 = vlaneseq
    %v546 = vshrl.u32 %v545, 7
    %v547 = vsub.s32 %v544, %v546
    %v548 = vrot.slane %v451, %v547
    %vm549 = vcmask 589312
    %v550 = vsel %vm549, %v548, %v543
    %v551 = vadd.s32 %v490, 4294967224
    %v552 = vlaneseq
    %v553 = vshrl.u32 %v552, 7
    %v554 = vsub.s32 %v551, %v553
    %v555 = vrot.slane %v454, %v554
    %vm556 = vcmask 654912
    %v557 = vsel %vm556, %v555, %v550
    %v558 = vadd.s32 %v490, 4294967216
    %v559 = vlaneseq
    %v560 = vshrl.u32 %v559, 7
    %v561 = vsub.s32 %v558, %v560
    %v562 = vrot.slane %v457, %v561
    %vm563 = vcmask 720512
    %v564 = vsel %vm563, %v562, %v557
    %v565 = vadd.s32 %v490, 4294967208
    %v566 = vlaneseq
    %v567 = vshrl.u32 %v566, 7
    %v568 = vsub.s32 %v565, %v567
    %v569 = vrot.slane %v460, %v568
    %vm570 = vcmask 786112
    %v571 = vsel %vm570, %v569, %v564
    %v572 = vadd.s32 %v490, 4294967200
    %v573 = vlaneseq
    %v574 = vshrl.u32 %v573, 7
    %v575 = vsub.s32 %v572, %v574
    %v576 = vrot.slane %v463, %v575
    %vm577 = vcmask 851712
    %v578 = vsel %vm577, %v576, %v571
    %v579 = vadd.s32 %v490, 4294967192
    %v580 = vlaneseq
    %v581 = vshrl.u32 %v580, 7
    %v582 = vsub.s32 %v579, %v581
    %v583 = vrot.slane %v466, %v582
    %vm584 = vcmask 917312
    %v585 = vsel %vm584, %v583, %v578
    %v586 = vadd.s32 %v490, 4294967184
    %v587 = vlaneseq
    %v588 = vshrl.u32 %v587, 7
    %v589 = vsub.s32 %v586, %v588
    %v590 = vrot.slane %v469, %v589
    %vm591 = vcmask 982912
    %v592 = vsel %vm591, %v590, %v585
    %v593 = vadd.s32 %v490, 4294967176
    %v594 = vlaneseq
    %v595 = vshrl.u32 %v594, 7
    %v596 = vsub.s32 %v593, %v595
    %v597 = vrot.slane %v472, %v596
    %vm598 = vcmask 1048512
    %v599 = vsel %vm598, %v597, %v592
    %601 = vst [vmem:[#allocation7] sm:$0x1] %v599
    // Predicated region
    $region18: #{tpu_custom_call.1} parent=1 // pred_check
      _
    $region19: #{tpu_custom_call.1} parent=1 // pred_check_branch
      %603 = sbr.rel (0) target = $region21
    $region20: #{tpu_custom_call.1} parent=1 // pred_region
      %s605 = ssub.s32 16, 16
      %606 = vsyncadd [#allocation4], %s605
      %s608 = sshll.u32 [#allocation7], 4
      %s609 = int_to_ptr.vmem [resolvable:$true] %s608
      %611 = dma.vmem_to_hbm [thread:$0]  %s609, 16, %s2, [#allocation4]
    $region21: #{tpu_custom_call.1} parent=1 // pred_fallthru
      _
    // Predicated region
    $region22: #{tpu_custom_call.1} parent=1 // pred_check
      _
    $region23: #{tpu_custom_call.1} parent=1 // pred_check_branch
      %613 = sbr.rel (0) target = $region25
    $region24: #{tpu_custom_call.1} parent=1 // pred_region
      %614 = dma.done [#allocation4], 16
    $region25: #{tpu_custom_call.1} parent=1 // pred_fallthru
      _
    %615 = vsyncpa [#allocation3], 1
    %616 = vsyncpa [#allocation6], 1
    %617 = vsyncpa [#allocation4], 1

</llo_original>
